<compile_context>
chip_gen: v5e
topology: v5e:2x2
jax: 0.10.0
libtpu: 0.0.40
codegen_flags: <defaults>
</compile_context>

<pallas_src>
import jax
import jax.numpy as jnp
from jax import lax
from jax.experimental import pallas as pl
from jax.experimental.pallas import tpu as pltpu


def _gru_recurrence_kernel(gi_ref, whc_ref, bhc_ref, hseq_ref, h_ref):
    """Fused-gate GRU recurrence for one (time_chunk, batch_tile) block.

    gi_ref  : (Tt, Bt, 3H) f32  input-side pre-activations (b_ih already folded in)
    whc_ref : (H, 3H)      bf16 fused hidden-side weights
    bhc_ref : (1, 3H)      f32  fused hidden-side bias
    hseq_ref: (Tt, Bt, H)  f32  output: hidden state at every timestep
    h_ref   : (Bt, H)      f32  VMEM scratch, persists across time chunks
    """
    H = whc_ref.shape[0]
    Tt = gi_ref.shape[0]

    # Reset hidden state at the start of each sequence (first time chunk).
    @pl.when(pl.program_id(1) == 0)
    def _():
        h_ref[...] = jnp.zeros_like(h_ref)

    # Hoist weight/bias loads out of the recurrence loop.
    w_h = whc_ref[...]          # (H, 3H) bf16
    b_h = bhc_ref[...]          # (1, 3H) f32

    def step(t, carry):
        gi_t = gi_ref[t]        # (Bt, 3H)
        h = h_ref[...]          # (Bt, H) f32
        # single fused hidden-side matmul per step (bf16 ops, f32 accumulate)
        gh = jnp.dot(h.astype(w_h.dtype), w_h,
                     preferred_element_type=jnp.float32) + b_h      # (Bt, 3H)
        s = gi_t + gh
        rz = jax.nn.sigmoid(s[:, :2 * H])
        r = rz[:, :H]
        z = rz[:, H:]
        n = jnp.tanh(gi_t[:, 2 * H:] + r * gh[:, 2 * H:])
        h_new = (1.0 - z) * n + z * h
        h_ref[...] = h_new
        hseq_ref[t] = h_new
        return carry

    lax.fori_loop(0, Tt, step, 0, unroll=min(Tt, 8))


def _pick_tile(n, max_tile):
    t = min(n, max_tile)
    while n % t:
        t -= 1
    return t


def gru_recurrence(gi_tm, w_hh, b_hh):
    """gi_tm: (T, B, 3H) f32, w_hh: (H, 3H), b_hh: (1, 3H) -> (T, B, H) f32."""
    T, B, G = gi_tm.shape
    H = w_hh.shape[0]
    assert G == 3 * H and w_hh.shape == (H, 3 * H) and b_hh.shape == (1, 3 * H)

    # Time chunking ("arbitrary") so activations are streamed, not fully resident.
    t_tile = _pick_tile(T, 64)
    # Batch tiling ("parallel"): blocks on the sublane axis must be the full dim
    # or a multiple of 8.
    b_tile = 8 if (B > 8 and B % 8 == 0) else B
    grid = (B // b_tile, T // t_tile)

    whc = w_hh.astype(jnp.bfloat16)      # bf16 MXU operands, f32 accumulation
    bhc = b_hh.astype(jnp.float32)

    return pl.pallas_call(
        _gru_recurrence_kernel,
        out_shape=jax.ShapeDtypeStruct((T, B, H), jnp.float32),
        grid_spec=pltpu.PrefetchScalarGridSpec(
            num_scalar_prefetch=0,
            grid=grid,
            in_specs=[
                pl.BlockSpec((t_tile, b_tile, 3 * H), lambda b, t: (t, b, 0)),
                pl.BlockSpec((H, 3 * H), lambda b, t: (0, 0)),
                pl.BlockSpec((1, 3 * H), lambda b, t: (0, 0)),
            ],
            out_specs=pl.BlockSpec((t_tile, b_tile, H), lambda b, t: (t, b, 0)),
            scratch_shapes=[pltpu.VMEM((b_tile, H), jnp.float32)],
        ),
        compiler_params=pltpu.CompilerParams(
            dimension_semantics=("parallel", "arbitrary"),
            vmem_limit_bytes=32 * 1024 * 1024,   # explicit: fits v7x's smaller VMEM
        ),
    )(gi_tm, whc, bhc)


def decoder_forward(x_ids, style, content, params):
    """Mirrors Decoder.forward.  x_ids: (B,T) int32, style: (B,S), content: (B,C)."""
    B, T = x_ids.shape

    # ---- glue (plain JAX): embedding gather + style/content broadcast/concat ----
    emb = params["embedding"][x_ids]                                   # (B, T, E)
    sc = jnp.concatenate([style, content], axis=1)                     # (B, S+C)
    sc = jnp.broadcast_to(sc[:, None, :], (B, T, sc.shape[-1]))
    x_cat = jnp.concatenate([emb, sc], axis=2)                         # (B, T, D_in)

    # ---- hoisted input-side projection: one big matmul, b_ih folded in ----
    gi = jnp.einsum("btd,dg->btg", x_cat, params["w_ih"],
                    preferred_element_type=jnp.float32) + params["b_ih"]  # (B,T,3H)
    gi_tm = jnp.transpose(gi, (1, 0, 2))                               # (T, B, 3H)

    # ---- Pallas kernel: the serial GRU recurrence ----
    h_seq_tm = gru_recurrence(gi_tm, params["w_hh"], params["b_hh"])   # (T, B, H)
    h_seq = jnp.transpose(h_seq_tm, (1, 0, 2))                         # (B, T, H)

    # ---- fc_out: one big (B*T, H) @ (H, V) matmul, off the critical path ----
    return jnp.einsum("bth,hv->btv", h_seq, params["w_out"],
                      preferred_element_type=jnp.float32) + params["b_out"]


def decoder_reference(x_ids, style, content, params):
    """Pure-JAX f32 reference (PyTorch GRU semantics, h0 = 0)."""
    B, T = x_ids.shape
    H = params["w_hh"].shape[0]
    emb = params["embedding"][x_ids]
    sc = jnp.concatenate([style, content], axis=1)
    sc = jnp.broadcast_to(sc[:, None, :], (B, T, sc.shape[-1]))
    x_cat = jnp.concatenate([emb, sc], axis=2)
    h = jnp.zeros((B, H), jnp.float32)
    outs = []
    for t in range(T):
        x_t = x_cat[:, t, :]
        gi = x_t @ params["w_ih"] + params["b_ih"]
        gh = h @ params["w_hh"] + params["b_hh"]
        r = jax.nn.sigmoid(gi[:, :H] + gh[:, :H])
        z = jax.nn.sigmoid(gi[:, H:2 * H] + gh[:, H:2 * H])
        n = jnp.tanh(gi[:, 2 * H:] + r * gh[:, 2 * H:])
        h = (1.0 - z) * n + z * h
        outs.append(h @ params["w_out"] + params["b_out"])
    return jnp.stack(outs, axis=1)


def init_params(key, vocab_size, embed_dim, hidden_dim, style_dim, content_dim):
    d_in = embed_dim + style_dim + content_dim
    ks = jax.random.split(key, 7)
    s = 0.1
    return {
        "embedding": s * jax.random.normal(ks[0], (vocab_size, embed_dim), jnp.float32),
        # fused gate layouts, gate order (r, z, n), pre-transposed for x @ W
        "w_ih": s * jax.random.normal(ks[1], (d_in, 3 * hidden_dim), jnp.float32),
        "w_hh": s * jax.random.normal(ks[2], (hidden_dim, 3 * hidden_dim), jnp.float32),
        "b_ih": s * jax.random.normal(ks[3], (1, 3 * hidden_dim), jnp.float32),
        "b_hh": s * jax.random.normal(ks[4], (1, 3 * hidden_dim), jnp.float32),
        "w_out": s * jax.random.normal(ks[5], (hidden_dim, vocab_size), jnp.float32),
        "b_out": s * jax.random.normal(ks[6], (1, vocab_size), jnp.float32),
    }


if __name__ == "__main__":
    vocab_size, embed_dim, hidden_dim = 32, 16, 32
    style_dim, content_dim = 8, 8
    B, T = 2, 8

    key = jax.random.PRNGKey(0)
    kp, kx, ksy, kco = jax.random.split(key, 4)
    params = init_params(kp, vocab_size, embed_dim, hidden_dim, style_dim, content_dim)

    x_ids = jax.random.randint(kx, (B, T), 0, vocab_size, dtype=jnp.int32)
    style = jax.random.normal(ksy, (B, style_dim), jnp.float32)
    content = jax.random.normal(kco, (B, content_dim), jnp.float32)

    out = jax.jit(decoder_forward)(x_ids, style, content, params)
    out = jax.block_until_ready(out)
    assert out.shape == (B, T, vocab_size), out.shape

    # correctness vs pure-f32 reference (kernel uses bf16 operands on the
    # hidden-side matmul with f32 accumulation -> loosened tolerance)
    ref = decoder_reference(x_ids, style, content, params)
    max_err = float(jnp.max(jnp.abs(out - ref)))
    assert max_err < 2e-2, max_err

    print("KERNEL_OK")
</pallas_src>

<mosaic_0001>
module attributes {stable_mosaic.version = 11 : i64} {
  func.func @_gru_recurrence_kernel(%arg0: i32, %arg1: i32, %arg2: memref<8x2x96xf32, #tpu.memory_space<vmem>>, %arg3: memref<32x96xbf16, #tpu.memory_space<vmem>>, %arg4: memref<1x96xf32, #tpu.memory_space<vmem>>, %arg5: memref<8x2x32xf32, #tpu.memory_space<vmem>>, %arg6: memref<2x32xf32, #tpu.memory_space<vmem>>) attributes {dimension_semantics = [#tpu.dimension_semantics<parallel>, #tpu.dimension_semantics<arbitrary>], iteration_bounds = array<i64: 1, 1>, scalar_prefetch = 0 : i64, scratch_operands = 1 : i64, tpu.core_type = #tpu.core_type<tc>, window_params = [{transform_indices = @transform_0, window_bounds = array<i64: 8, 2, 96>}, {pipeline_mode = #tpu.pipeline_mode<synchronous>, transform_indices = @transform_1, window_bounds = array<i64: 32, 96>}, {pipeline_mode = #tpu.pipeline_mode<synchronous>, transform_indices = @transform_2, window_bounds = array<i64: 1, 96>}, {transform_indices = @transform_3, window_bounds = array<i64: 8, 2, 32>}]} {
    %c0_i32 = arith.constant 0 : i32
    %0 = arith.cmpi eq, %arg1, %c0_i32 : i32
    %1 = arith.extui %0 : i1 to i32
    %c0_i32_0 = arith.constant 0 : i32
    %2 = arith.cmpi ne, %1, %c0_i32_0 : i32
    scf.if %2 {
      %cst_92 = arith.constant 0.000000e+00 : f32
      %261 = vector.broadcast %cst_92 : f32 to vector<2x32xf32>
      %c0_93 = arith.constant 0 : index
      %c0_94 = arith.constant 0 : index
      %262 = vector.load %arg6[%c0_93, %c0_94] : memref<2x32xf32, #tpu.memory_space<vmem>>, vector<2x32xf32>
      tpu.vector_store %arg6[%c0_93, %c0_94], %261 {strides = array<i32>} : memref<2x32xf32, #tpu.memory_space<vmem>>, vector<2x32xf32>,
    } else {
    }
    %c0 = arith.constant 0 : index
    %c0_1 = arith.constant 0 : index
    %3 = vector.load %arg3[%c0, %c0_1] : memref<32x96xbf16, #tpu.memory_space<vmem>>, vector<32x96xbf16>
    %c0_2 = arith.constant 0 : index
    %c0_3 = arith.constant 0 : index
    %4 = vector.load %arg4[%c0_2, %c0_3] : memref<1x96xf32, #tpu.memory_space<vmem>>, vector<1x96xf32>
    %c0_i32_4 = arith.constant 0 : i32
    %5 = arith.index_cast %c0_i32_4 : i32 to index
    %c0_5 = arith.constant 0 : index
    %c0_6 = arith.constant 0 : index
    %6 = vector.load %arg2[%5, %c0_5, %c0_6] : memref<8x2x96xf32, #tpu.memory_space<vmem>>, vector<1x2x96xf32>
    %7 = vector.shape_cast %6 : vector<1x2x96xf32> to vector<2x96xf32>
    %c0_7 = arith.constant 0 : index
    %c0_8 = arith.constant 0 : index
    %8 = vector.load %arg6[%c0_7, %c0_8] : memref<2x32xf32, #tpu.memory_space<vmem>>, vector<2x32xf32>
    %9 = arith.truncf %8 : vector<2x32xf32> to vector<2x32xbf16>
    %cst = arith.constant dense<0.000000e+00> : vector<2x96xf32>
    %10 = tpu.matmul %9, %3, %cst {dimension_numbers = #tpu.dot_dimension_numbers<[1], [0], [0], [1], [0, 0, 1, 1], [], []>} : vector<2x32xbf16>, vector<32x96xbf16>, vector<2x96xf32> -> vector<2x96xf32>
    %11 = vector.broadcast %4 : vector<1x96xf32> to vector<2x96xf32>
    %12 = arith.addf %10, %11 : vector<2x96xf32>
    %13 = arith.addf %7, %12 : vector<2x96xf32>
    %14 = vector.extract_strided_slice %13 {offsets = [0, 0], sizes = [2, 64], strides = [1, 1]} : vector<2x96xf32> to vector<2x64xf32>
    %15 = arith.negf %14 : vector<2x64xf32>
    %16 = math.exp %15 : vector<2x64xf32>
    %cst_9 = arith.constant 1.000000e+00 : f32
    %17 = vector.broadcast %cst_9 : f32 to vector<2x64xf32>
    %18 = arith.addf %17, %16 : vector<2x64xf32>
    %19 = arith.divf %17, %18 : vector<2x64xf32>
    %20 = vector.extract_strided_slice %19 {offsets = [0, 0], sizes = [2, 32], strides = [1, 1]} : vector<2x64xf32> to vector<2x32xf32>
    %21 = vector.extract_strided_slice %19 {offsets = [0, 32], sizes = [2, 32], strides = [1, 1]} : vector<2x64xf32> to vector<2x32xf32>
    %22 = vector.extract_strided_slice %7 {offsets = [0, 64], sizes = [2, 32], strides = [1, 1]} : vector<2x96xf32> to vector<2x32xf32>
    %23 = vector.extract_strided_slice %12 {offsets = [0, 64], sizes = [2, 32], strides = [1, 1]} : vector<2x96xf32> to vector<2x32xf32>
    %24 = arith.mulf %20, %23 : vector<2x32xf32>
    %25 = arith.addf %22, %24 : vector<2x32xf32>
    %26 = math.tanh %25 : vector<2x32xf32>
    %cst_10 = arith.constant 1.000000e+00 : f32
    %27 = vector.broadcast %cst_10 : f32 to vector<2x32xf32>
    %28 = arith.subf %27, %21 : vector<2x32xf32>
    %29 = arith.mulf %28, %26 : vector<2x32xf32>
    %30 = arith.mulf %21, %8 : vector<2x32xf32>
    %31 = arith.addf %29, %30 : vector<2x32xf32>
    %c0_11 = arith.constant 0 : index
    %c0_12 = arith.constant 0 : index
    %32 = vector.load %arg6[%c0_11, %c0_12] : memref<2x32xf32, #tpu.memory_space<vmem>>, vector<2x32xf32>
    tpu.vector_store %arg6[%c0_11, %c0_12], %31 {strides = array<i32>} : memref<2x32xf32, #tpu.memory_space<vmem>>, vector<2x32xf32>,
    %33 = arith.index_cast %c0_i32_4 : i32 to index
    %c0_13 = arith.constant 0 : index
    %c0_14 = arith.constant 0 : index
    %34 = vector.load %arg5[%33, %c0_13, %c0_14] : memref<8x2x32xf32, #tpu.memory_space<vmem>>, vector<1x2x32xf32>
    %35 = vector.shape_cast %34 : vector<1x2x32xf32> to vector<2x32xf32>
    %36 = vector.shape_cast %31 : vector<2x32xf32> to vector<1x2x32xf32>
    tpu.vector_store %arg5[%33, %c0_13, %c0_14], %36 {strides = array<i32>} : memref<8x2x32xf32, #tpu.memory_space<vmem>>, vector<1x2x32xf32>,
    %c1_i32 = arith.constant 1 : i32
    %37 = arith.index_cast %c1_i32 : i32 to index
    %c0_15 = arith.constant 0 : index
    %c0_16 = arith.constant 0 : index
    %38 = vector.load %arg2[%37, %c0_15, %c0_16] : memref<8x2x96xf32, #tpu.memory_space<vmem>>, vector<1x2x96xf32>
    %39 = vector.shape_cast %38 : vector<1x2x96xf32> to vector<2x96xf32>
    %c0_17 = arith.constant 0 : index
    %c0_18 = arith.constant 0 : index
    %40 = vector.load %arg6[%c0_17, %c0_18] : memref<2x32xf32, #tpu.memory_space<vmem>>, vector<2x32xf32>
    %41 = arith.truncf %40 : vector<2x32xf32> to vector<2x32xbf16>
    %cst_19 = arith.constant dense<0.000000e+00> : vector<2x96xf32>
    %42 = tpu.matmul %41, %3, %cst_19 {dimension_numbers = #tpu.dot_dimension_numbers<[1], [0], [0], [1], [0, 0, 1, 1], [], []>} : vector<2x32xbf16>, vector<32x96xbf16>, vector<2x96xf32> -> vector<2x96xf32>
    %43 = vector.broadcast %4 : vector<1x96xf32> to vector<2x96xf32>
    %44 = arith.addf %42, %43 : vector<2x96xf32>
    %45 = arith.addf %39, %44 : vector<2x96xf32>
    %46 = vector.extract_strided_slice %45 {offsets = [0, 0], sizes = [2, 64], strides = [1, 1]} : vector<2x96xf32> to vector<2x64xf32>
    %47 = arith.negf %46 : vector<2x64xf32>
    %48 = math.exp %47 : vector<2x64xf32>
    %cst_20 = arith.constant 1.000000e+00 : f32
    %49 = vector.broadcast %cst_20 : f32 to vector<2x64xf32>
    %50 = arith.addf %49, %48 : vector<2x64xf32>
    %51 = arith.divf %49, %50 : vector<2x64xf32>
    %52 = vector.extract_strided_slice %51 {offsets = [0, 0], sizes = [2, 32], strides = [1, 1]} : vector<2x64xf32> to vector<2x32xf32>
    %53 = vector.extract_strided_slice %51 {offsets = [0, 32], sizes = [2, 32], strides = [1, 1]} : vector<2x64xf32> to vector<2x32xf32>
    %54 = vector.extract_strided_slice %39 {offsets = [0, 64], sizes = [2, 32], strides = [1, 1]} : vector<2x96xf32> to vector<2x32xf32>
    %55 = vector.extract_strided_slice %44 {offsets = [0, 64], sizes = [2, 32], strides = [1, 1]} : vector<2x96xf32> to vector<2x32xf32>
    %56 = arith.mulf %52, %55 : vector<2x32xf32>
    %57 = arith.addf %54, %56 : vector<2x32xf32>
    %58 = math.tanh %57 : vector<2x32xf32>
    %cst_21 = arith.constant 1.000000e+00 : f32
    %59 = vector.broadcast %cst_21 : f32 to vector<2x32xf32>
    %60 = arith.subf %59, %53 : vector<2x32xf32>
    %61 = arith.mulf %60, %58 : vector<2x32xf32>
    %62 = arith.mulf %53, %40 : vector<2x32xf32>
    %63 = arith.addf %61, %62 : vector<2x32xf32>
    %c0_22 = arith.constant 0 : index
    %c0_23 = arith.constant 0 : index
    %64 = vector.load %arg6[%c0_22, %c0_23] : memref<2x32xf32, #tpu.memory_space<vmem>>, vector<2x32xf32>
    tpu.vector_store %arg6[%c0_22, %c0_23], %63 {strides = array<i32>} : memref<2x32xf32, #tpu.memory_space<vmem>>, vector<2x32xf32>,
    %65 = arith.index_cast %c1_i32 : i32 to index
    %c0_24 = arith.constant 0 : index
    %c0_25 = arith.constant 0 : index
    %66 = vector.load %arg5[%65, %c0_24, %c0_25] : memref<8x2x32xf32, #tpu.memory_space<vmem>>, vector<1x2x32xf32>
    %67 = vector.shape_cast %66 : vector<1x2x32xf32> to vector<2x32xf32>
    %68 = vector.shape_cast %63 : vector<2x32xf32> to vector<1x2x32xf32>
    tpu.vector_store %arg5[%65, %c0_24, %c0_25], %68 {strides = array<i32>} : memref<8x2x32xf32, #tpu.memory_space<vmem>>, vector<1x2x32xf32>,
    %c2_i32 = arith.constant 2 : i32
    %69 = arith.index_cast %c2_i32 : i32 to index
    %c0_26 = arith.constant 0 : index
    %c0_27 = arith.constant 0 : index
    %70 = vector.load %arg2[%69, %c0_26, %c0_27] : memref<8x2x96xf32, #tpu.memory_space<vmem>>, vector<1x2x96xf32>
    %71 = vector.shape_cast %70 : vector<1x2x96xf32> to vector<2x96xf32>
    %c0_28 = arith.constant 0 : index
    %c0_29 = arith.constant 0 : index
    %72 = vector.load %arg6[%c0_28, %c0_29] : memref<2x32xf32, #tpu.memory_space<vmem>>, vector<2x32xf32>
    %73 = arith.truncf %72 : vector<2x32xf32> to vector<2x32xbf16>
    %cst_30 = arith.constant dense<0.000000e+00> : vector<2x96xf32>
    %74 = tpu.matmul %73, %3, %cst_30 {dimension_numbers = #tpu.dot_dimension_numbers<[1], [0], [0], [1], [0, 0, 1, 1], [], []>} : vector<2x32xbf16>, vector<32x96xbf16>, vector<2x96xf32> -> vector<2x96xf32>
    %75 = vector.broadcast %4 : vector<1x96xf32> to vector<2x96xf32>
    %76 = arith.addf %74, %75 : vector<2x96xf32>
    %77 = arith.addf %71, %76 : vector<2x96xf32>
    %78 = vector.extract_strided_slice %77 {offsets = [0, 0], sizes = [2, 64], strides = [1, 1]} : vector<2x96xf32> to vector<2x64xf32>
    %79 = arith.negf %78 : vector<2x64xf32>
    %80 = math.exp %79 : vector<2x64xf32>
    %cst_31 = arith.constant 1.000000e+00 : f32
    %81 = vector.broadcast %cst_31 : f32 to vector<2x64xf32>
    %82 = arith.addf %81, %80 : vector<2x64xf32>
    %83 = arith.divf %81, %82 : vector<2x64xf32>
    %84 = vector.extract_strided_slice %83 {offsets = [0, 0], sizes = [2, 32], strides = [1, 1]} : vector<2x64xf32> to vector<2x32xf32>
    %85 = vector.extract_strided_slice %83 {offsets = [0, 32], sizes = [2, 32], strides = [1, 1]} : vector<2x64xf32> to vector<2x32xf32>
    %86 = vector.extract_strided_slice %71 {offsets = [0, 64], sizes = [2, 32], strides = [1, 1]} : vector<2x96xf32> to vector<2x32xf32>
    %87 = vector.extract_strided_slice %76 {offsets = [0, 64], sizes = [2, 32], strides = [1, 1]} : vector<2x96xf32> to vector<2x32xf32>
    %88 = arith.mulf %84, %87 : vector<2x32xf32>
    %89 = arith.addf %86, %88 : vector<2x32xf32>
    %90 = math.tanh %89 : vector<2x32xf32>
    %cst_32 = arith.constant 1.000000e+00 : f32
    %91 = vector.broadcast %cst_32 : f32 to vector<2x32xf32>
    %92 = arith.subf %91, %85 : vector<2x32xf32>
    %93 = arith.mulf %92, %90 : vector<2x32xf32>
    %94 = arith.mulf %85, %72 : vector<2x32xf32>
    %95 = arith.addf %93, %94 : vector<2x32xf32>
    %c0_33 = arith.constant 0 : index
    %c0_34 = arith.constant 0 : index
    %96 = vector.load %arg6[%c0_33, %c0_34] : memref<2x32xf32, #tpu.memory_space<vmem>>, vector<2x32xf32>
    tpu.vector_store %arg6[%c0_33, %c0_34], %95 {strides = array<i32>} : memref<2x32xf32, #tpu.memory_space<vmem>>, vector<2x32xf32>,
    %97 = arith.index_cast %c2_i32 : i32 to index
    %c0_35 = arith.constant 0 : index
    %c0_36 = arith.constant 0 : index
    %98 = vector.load %arg5[%97, %c0_35, %c0_36] : memref<8x2x32xf32, #tpu.memory_space<vmem>>, vector<1x2x32xf32>
    %99 = vector.shape_cast %98 : vector<1x2x32xf32> to vector<2x32xf32>
    %100 = vector.shape_cast %95 : vector<2x32xf32> to vector<1x2x32xf32>
    tpu.vector_store %arg5[%97, %c0_35, %c0_36], %100 {strides = array<i32>} : memref<8x2x32xf32, #tpu.memory_space<vmem>>, vector<1x2x32xf32>,
    %c3_i32 = arith.constant 3 : i32
    %101 = arith.index_cast %c3_i32 : i32 to index
    %c0_37 = arith.constant 0 : index
    %c0_38 = arith.constant 0 : index
    %102 = vector.load %arg2[%101, %c0_37, %c0_38] : memref<8x2x96xf32, #tpu.memory_space<vmem>>, vector<1x2x96xf32>
    %103 = vector.shape_cast %102 : vector<1x2x96xf32> to vector<2x96xf32>
    %c0_39 = arith.constant 0 : index
    %c0_40 = arith.constant 0 : index
    %104 = vector.load %arg6[%c0_39, %c0_40] : memref<2x32xf32, #tpu.memory_space<vmem>>, vector<2x32xf32>
    %105 = arith.truncf %104 : vector<2x32xf32> to vector<2x32xbf16>
    %cst_41 = arith.constant dense<0.000000e+00> : vector<2x96xf32>
    %106 = tpu.matmul %105, %3, %cst_41 {dimension_numbers = #tpu.dot_dimension_numbers<[1], [0], [0], [1], [0, 0, 1, 1], [], []>} : vector<2x32xbf16>, vector<32x96xbf16>, vector<2x96xf32> -> vector<2x96xf32>
    %107 = vector.broadcast %4 : vector<1x96xf32> to vector<2x96xf32>
    %108 = arith.addf %106, %107 : vector<2x96xf32>
    %109 = arith.addf %103, %108 : vector<2x96xf32>
    %110 = vector.extract_strided_slice %109 {offsets = [0, 0], sizes = [2, 64], strides = [1, 1]} : vector<2x96xf32> to vector<2x64xf32>
    %111 = arith.negf %110 : vector<2x64xf32>
    %112 = math.exp %111 : vector<2x64xf32>
    %cst_42 = arith.constant 1.000000e+00 : f32
    %113 = vector.broadcast %cst_42 : f32 to vector<2x64xf32>
    %114 = arith.addf %113, %112 : vector<2x64xf32>
    %115 = arith.divf %113, %114 : vector<2x64xf32>
    %116 = vector.extract_strided_slice %115 {offsets = [0, 0], sizes = [2, 32], strides = [1, 1]} : vector<2x64xf32> to vector<2x32xf32>
    %117 = vector.extract_strided_slice %115 {offsets = [0, 32], sizes = [2, 32], strides = [1, 1]} : vector<2x64xf32> to vector<2x32xf32>
    %118 = vector.extract_strided_slice %103 {offsets = [0, 64], sizes = [2, 32], strides = [1, 1]} : vector<2x96xf32> to vector<2x32xf32>
    %119 = vector.extract_strided_slice %108 {offsets = [0, 64], sizes = [2, 32], strides = [1, 1]} : vector<2x96xf32> to vector<2x32xf32>
    %120 = arith.mulf %116, %119 : vector<2x32xf32>
    %121 = arith.addf %118, %120 : vector<2x32xf32>
    %122 = math.tanh %121 : vector<2x32xf32>
    %cst_43 = arith.constant 1.000000e+00 : f32
    %123 = vector.broadcast %cst_43 : f32 to vector<2x32xf32>
    %124 = arith.subf %123, %117 : vector<2x32xf32>
    %125 = arith.mulf %124, %122 : vector<2x32xf32>
    %126 = arith.mulf %117, %104 : vector<2x32xf32>
    %127 = arith.addf %125, %126 : vector<2x32xf32>
    %c0_44 = arith.constant 0 : index
    %c0_45 = arith.constant 0 : index
    %128 = vector.load %arg6[%c0_44, %c0_45] : memref<2x32xf32, #tpu.memory_space<vmem>>, vector<2x32xf32>
    tpu.vector_store %arg6[%c0_44, %c0_45], %127 {strides = array<i32>} : memref<2x32xf32, #tpu.memory_space<vmem>>, vector<2x32xf32>,
    %129 = arith.index_cast %c3_i32 : i32 to index
    %c0_46 = arith.constant 0 : index
    %c0_47 = arith.constant 0 : index
    %130 = vector.load %arg5[%129, %c0_46, %c0_47] : memref<8x2x32xf32, #tpu.memory_space<vmem>>, vector<1x2x32xf32>
    %131 = vector.shape_cast %130 : vector<1x2x32xf32> to vector<2x32xf32>
    %132 = vector.shape_cast %127 : vector<2x32xf32> to vector<1x2x32xf32>
    tpu.vector_store %arg5[%129, %c0_46, %c0_47], %132 {strides = array<i32>} : memref<8x2x32xf32, #tpu.memory_space<vmem>>, vector<1x2x32xf32>,
    %c4_i32 = arith.constant 4 : i32
    %133 = arith.index_cast %c4_i32 : i32 to index
    %c0_48 = arith.constant 0 : index
    %c0_49 = arith.constant 0 : index
    %134 = vector.load %arg2[%133, %c0_48, %c0_49] : memref<8x2x96xf32, #tpu.memory_space<vmem>>, vector<1x2x96xf32>
    %135 = vector.shape_cast %134 : vector<1x2x96xf32> to vector<2x96xf32>
    %c0_50 = arith.constant 0 : index
    %c0_51 = arith.constant 0 : index
    %136 = vector.load %arg6[%c0_50, %c0_51] : memref<2x32xf32, #tpu.memory_space<vmem>>, vector<2x32xf32>
    %137 = arith.truncf %136 : vector<2x32xf32> to vector<2x32xbf16>
    %cst_52 = arith.constant dense<0.000000e+00> : vector<2x96xf32>
    %138 = tpu.matmul %137, %3, %cst_52 {dimension_numbers = #tpu.dot_dimension_numbers<[1], [0], [0], [1], [0, 0, 1, 1], [], []>} : vector<2x32xbf16>, vector<32x96xbf16>, vector<2x96xf32> -> vector<2x96xf32>
    %139 = vector.broadcast %4 : vector<1x96xf32> to vector<2x96xf32>
    %140 = arith.addf %138, %139 : vector<2x96xf32>
    %141 = arith.addf %135, %140 : vector<2x96xf32>
    %142 = vector.extract_strided_slice %141 {offsets = [0, 0], sizes = [2, 64], strides = [1, 1]} : vector<2x96xf32> to vector<2x64xf32>
    %143 = arith.negf %142 : vector<2x64xf32>
    %144 = math.exp %143 : vector<2x64xf32>
    %cst_53 = arith.constant 1.000000e+00 : f32
    %145 = vector.broadcast %cst_53 : f32 to vector<2x64xf32>
    %146 = arith.addf %145, %144 : vector<2x64xf32>
    %147 = arith.divf %145, %146 : vector<2x64xf32>
    %148 = vector.extract_strided_slice %147 {offsets = [0, 0], sizes = [2, 32], strides = [1, 1]} : vector<2x64xf32> to vector<2x32xf32>
    %149 = vector.extract_strided_slice %147 {offsets = [0, 32], sizes = [2, 32], strides = [1, 1]} : vector<2x64xf32> to vector<2x32xf32>
    %150 = vector.extract_strided_slice %135 {offsets = [0, 64], sizes = [2, 32], strides = [1, 1]} : vector<2x96xf32> to vector<2x32xf32>
    %151 = vector.extract_strided_slice %140 {offsets = [0, 64], sizes = [2, 32], strides = [1, 1]} : vector<2x96xf32> to vector<2x32xf32>
    %152 = arith.mulf %148, %151 : vector<2x32xf32>
    %153 = arith.addf %150, %152 : vector<2x32xf32>
    %154 = math.tanh %153 : vector<2x32xf32>
    %cst_54 = arith.constant 1.000000e+00 : f32
    %155 = vector.broadcast %cst_54 : f32 to vector<2x32xf32>
    %156 = arith.subf %155, %149 : vector<2x32xf32>
    %157 = arith.mulf %156, %154 : vector<2x32xf32>
    %158 = arith.mulf %149, %136 : vector<2x32xf32>
    %159 = arith.addf %157, %158 : vector<2x32xf32>
    %c0_55 = arith.constant 0 : index
    %c0_56 = arith.constant 0 : index
    %160 = vector.load %arg6[%c0_55, %c0_56] : memref<2x32xf32, #tpu.memory_space<vmem>>, vector<2x32xf32>
    tpu.vector_store %arg6[%c0_55, %c0_56], %159 {strides = array<i32>} : memref<2x32xf32, #tpu.memory_space<vmem>>, vector<2x32xf32>,
    %161 = arith.index_cast %c4_i32 : i32 to index
    %c0_57 = arith.constant 0 : index
    %c0_58 = arith.constant 0 : index
    %162 = vector.load %arg5[%161, %c0_57, %c0_58] : memref<8x2x32xf32, #tpu.memory_space<vmem>>, vector<1x2x32xf32>
    %163 = vector.shape_cast %162 : vector<1x2x32xf32> to vector<2x32xf32>
    %164 = vector.shape_cast %159 : vector<2x32xf32> to vector<1x2x32xf32>
    tpu.vector_store %arg5[%161, %c0_57, %c0_58], %164 {strides = array<i32>} : memref<8x2x32xf32, #tpu.memory_space<vmem>>, vector<1x2x32xf32>,
    %c5_i32 = arith.constant 5 : i32
    %165 = arith.index_cast %c5_i32 : i32 to index
    %c0_59 = arith.constant 0 : index
    %c0_60 = arith.constant 0 : index
    %166 = vector.load %arg2[%165, %c0_59, %c0_60] : memref<8x2x96xf32, #tpu.memory_space<vmem>>, vector<1x2x96xf32>
    %167 = vector.shape_cast %166 : vector<1x2x96xf32> to vector<2x96xf32>
    %c0_61 = arith.constant 0 : index
    %c0_62 = arith.constant 0 : index
    %168 = vector.load %arg6[%c0_61, %c0_62] : memref<2x32xf32, #tpu.memory_space<vmem>>, vector<2x32xf32>
    %169 = arith.truncf %168 : vector<2x32xf32> to vector<2x32xbf16>
    %cst_63 = arith.constant dense<0.000000e+00> : vector<2x96xf32>
    %170 = tpu.matmul %169, %3, %cst_63 {dimension_numbers = #tpu.dot_dimension_numbers<[1], [0], [0], [1], [0, 0, 1, 1], [], []>} : vector<2x32xbf16>, vector<32x96xbf16>, vector<2x96xf32> -> vector<2x96xf32>
    %171 = vector.broadcast %4 : vector<1x96xf32> to vector<2x96xf32>
    %172 = arith.addf %170, %171 : vector<2x96xf32>
    %173 = arith.addf %167, %172 : vector<2x96xf32>
    %174 = vector.extract_strided_slice %173 {offsets = [0, 0], sizes = [2, 64], strides = [1, 1]} : vector<2x96xf32> to vector<2x64xf32>
    %175 = arith.negf %174 : vector<2x64xf32>
    %176 = math.exp %175 : vector<2x64xf32>
    %cst_64 = arith.constant 1.000000e+00 : f32
    %177 = vector.broadcast %cst_64 : f32 to vector<2x64xf32>
    %178 = arith.addf %177, %176 : vector<2x64xf32>
    %179 = arith.divf %177, %178 : vector<2x64xf32>
    %180 = vector.extract_strided_slice %179 {offsets = [0, 0], sizes = [2, 32], strides = [1, 1]} : vector<2x64xf32> to vector<2x32xf32>
    %181 = vector.extract_strided_slice %179 {offsets = [0, 32], sizes = [2, 32], strides = [1, 1]} : vector<2x64xf32> to vector<2x32xf32>
    %182 = vector.extract_strided_slice %167 {offsets = [0, 64], sizes = [2, 32], strides = [1, 1]} : vector<2x96xf32> to vector<2x32xf32>
    %183 = vector.extract_strided_slice %172 {offsets = [0, 64], sizes = [2, 32], strides = [1, 1]} : vector<2x96xf32> to vector<2x32xf32>
    %184 = arith.mulf %180, %183 : vector<2x32xf32>
    %185 = arith.addf %182, %184 : vector<2x32xf32>
    %186 = math.tanh %185 : vector<2x32xf32>
    %cst_65 = arith.constant 1.000000e+00 : f32
    %187 = vector.broadcast %cst_65 : f32 to vector<2x32xf32>
    %188 = arith.subf %187, %181 : vector<2x32xf32>
    %189 = arith.mulf %188, %186 : vector<2x32xf32>
    %190 = arith.mulf %181, %168 : vector<2x32xf32>
    %191 = arith.addf %189, %190 : vector<2x32xf32>
    %c0_66 = arith.constant 0 : index
    %c0_67 = arith.constant 0 : index
    %192 = vector.load %arg6[%c0_66, %c0_67] : memref<2x32xf32, #tpu.memory_space<vmem>>, vector<2x32xf32>
    tpu.vector_store %arg6[%c0_66, %c0_67], %191 {strides = array<i32>} : memref<2x32xf32, #tpu.memory_space<vmem>>, vector<2x32xf32>,
    %193 = arith.index_cast %c5_i32 : i32 to index
    %c0_68 = arith.constant 0 : index
    %c0_69 = arith.constant 0 : index
    %194 = vector.load %arg5[%193, %c0_68, %c0_69] : memref<8x2x32xf32, #tpu.memory_space<vmem>>, vector<1x2x32xf32>
    %195 = vector.shape_cast %194 : vector<1x2x32xf32> to vector<2x32xf32>
    %196 = vector.shape_cast %191 : vector<2x32xf32> to vector<1x2x32xf32>
    tpu.vector_store %arg5[%193, %c0_68, %c0_69], %196 {strides = array<i32>} : memref<8x2x32xf32, #tpu.memory_space<vmem>>, vector<1x2x32xf32>,
    %c6_i32 = arith.constant 6 : i32
    %197 = arith.index_cast %c6_i32 : i32 to index
    %c0_70 = arith.constant 0 : index
    %c0_71 = arith.constant 0 : index
    %198 = vector.load %arg2[%197, %c0_70, %c0_71] : memref<8x2x96xf32, #tpu.memory_space<vmem>>, vector<1x2x96xf32>
    %199 = vector.shape_cast %198 : vector<1x2x96xf32> to vector<2x96xf32>
    %c0_72 = arith.constant 0 : index
    %c0_73 = arith.constant 0 : index
    %200 = vector.load %arg6[%c0_72, %c0_73] : memref<2x32xf32, #tpu.memory_space<vmem>>, vector<2x32xf32>
    %201 = arith.truncf %200 : vector<2x32xf32> to vector<2x32xbf16>
    %cst_74 = arith.constant dense<0.000000e+00> : vector<2x96xf32>
    %202 = tpu.matmul %201, %3, %cst_74 {dimension_numbers = #tpu.dot_dimension_numbers<[1], [0], [0], [1], [0, 0, 1, 1], [], []>} : vector<2x32xbf16>, vector<32x96xbf16>, vector<2x96xf32> -> vector<2x96xf32>
    %203 = vector.broadcast %4 : vector<1x96xf32> to vector<2x96xf32>
    %204 = arith.addf %202, %203 : vector<2x96xf32>
    %205 = arith.addf %199, %204 : vector<2x96xf32>
    %206 = vector.extract_strided_slice %205 {offsets = [0, 0], sizes = [2, 64], strides = [1, 1]} : vector<2x96xf32> to vector<2x64xf32>
    %207 = arith.negf %206 : vector<2x64xf32>
    %208 = math.exp %207 : vector<2x64xf32>
    %cst_75 = arith.constant 1.000000e+00 : f32
    %209 = vector.broadcast %cst_75 : f32 to vector<2x64xf32>
    %210 = arith.addf %209, %208 : vector<2x64xf32>
    %211 = arith.divf %209, %210 : vector<2x64xf32>
    %212 = vector.extract_strided_slice %211 {offsets = [0, 0], sizes = [2, 32], strides = [1, 1]} : vector<2x64xf32> to vector<2x32xf32>
    %213 = vector.extract_strided_slice %211 {offsets = [0, 32], sizes = [2, 32], strides = [1, 1]} : vector<2x64xf32> to vector<2x32xf32>
    %214 = vector.extract_strided_slice %199 {offsets = [0, 64], sizes = [2, 32], strides = [1, 1]} : vector<2x96xf32> to vector<2x32xf32>
    %215 = vector.extract_strided_slice %204 {offsets = [0, 64], sizes = [2, 32], strides = [1, 1]} : vector<2x96xf32> to vector<2x32xf32>
    %216 = arith.mulf %212, %215 : vector<2x32xf32>
    %217 = arith.addf %214, %216 : vector<2x32xf32>
    %218 = math.tanh %217 : vector<2x32xf32>
    %cst_76 = arith.constant 1.000000e+00 : f32
    %219 = vector.broadcast %cst_76 : f32 to vector<2x32xf32>
    %220 = arith.subf %219, %213 : vector<2x32xf32>
    %221 = arith.mulf %220, %218 : vector<2x32xf32>
    %222 = arith.mulf %213, %200 : vector<2x32xf32>
    %223 = arith.addf %221, %222 : vector<2x32xf32>
    %c0_77 = arith.constant 0 : index
    %c0_78 = arith.constant 0 : index
    %224 = vector.load %arg6[%c0_77, %c0_78] : memref<2x32xf32, #tpu.memory_space<vmem>>, vector<2x32xf32>
    tpu.vector_store %arg6[%c0_77, %c0_78], %223 {strides = array<i32>} : memref<2x32xf32, #tpu.memory_space<vmem>>, vector<2x32xf32>,
    %225 = arith.index_cast %c6_i32 : i32 to index
    %c0_79 = arith.constant 0 : index
    %c0_80 = arith.constant 0 : index
    %226 = vector.load %arg5[%225, %c0_79, %c0_80] : memref<8x2x32xf32, #tpu.memory_space<vmem>>, vector<1x2x32xf32>
    %227 = vector.shape_cast %226 : vector<1x2x32xf32> to vector<2x32xf32>
    %228 = vector.shape_cast %223 : vector<2x32xf32> to vector<1x2x32xf32>
    tpu.vector_store %arg5[%225, %c0_79, %c0_80], %228 {strides = array<i32>} : memref<8x2x32xf32, #tpu.memory_space<vmem>>, vector<1x2x32xf32>,
    %c7_i32 = arith.constant 7 : i32
    %229 = arith.index_cast %c7_i32 : i32 to index
    %c0_81 = arith.constant 0 : index
    %c0_82 = arith.constant 0 : index
    %230 = vector.load %arg2[%229, %c0_81, %c0_82] : memref<8x2x96xf32, #tpu.memory_space<vmem>>, vector<1x2x96xf32>
    %231 = vector.shape_cast %230 : vector<1x2x96xf32> to vector<2x96xf32>
    %c0_83 = arith.constant 0 : index
    %c0_84 = arith.constant 0 : index
    %232 = vector.load %arg6[%c0_83, %c0_84] : memref<2x32xf32, #tpu.memory_space<vmem>>, vector<2x32xf32>
    %233 = arith.truncf %232 : vector<2x32xf32> to vector<2x32xbf16>
    %cst_85 = arith.constant dense<0.000000e+00> : vector<2x96xf32>
    %234 = tpu.matmul %233, %3, %cst_85 {dimension_numbers = #tpu.dot_dimension_numbers<[1], [0], [0], [1], [0, 0, 1, 1], [], []>} : vector<2x32xbf16>, vector<32x96xbf16>, vector<2x96xf32> -> vector<2x96xf32>
    %235 = vector.broadcast %4 : vector<1x96xf32> to vector<2x96xf32>
    %236 = arith.addf %234, %235 : vector<2x96xf32>
    %237 = arith.addf %231, %236 : vector<2x96xf32>
    %238 = vector.extract_strided_slice %237 {offsets = [0, 0], sizes = [2, 64], strides = [1, 1]} : vector<2x96xf32> to vector<2x64xf32>
    %239 = arith.negf %238 : vector<2x64xf32>
    %240 = math.exp %239 : vector<2x64xf32>
    %cst_86 = arith.constant 1.000000e+00 : f32
    %241 = vector.broadcast %cst_86 : f32 to vector<2x64xf32>
    %242 = arith.addf %241, %240 : vector<2x64xf32>
    %243 = arith.divf %241, %242 : vector<2x64xf32>
    %244 = vector.extract_strided_slice %243 {offsets = [0, 0], sizes = [2, 32], strides = [1, 1]} : vector<2x64xf32> to vector<2x32xf32>
    %245 = vector.extract_strided_slice %243 {offsets = [0, 32], sizes = [2, 32], strides = [1, 1]} : vector<2x64xf32> to vector<2x32xf32>
    %246 = vector.extract_strided_slice %231 {offsets = [0, 64], sizes = [2, 32], strides = [1, 1]} : vector<2x96xf32> to vector<2x32xf32>
    %247 = vector.extract_strided_slice %236 {offsets = [0, 64], sizes = [2, 32], strides = [1, 1]} : vector<2x96xf32> to vector<2x32xf32>
    %248 = arith.mulf %244, %247 : vector<2x32xf32>
    %249 = arith.addf %246, %248 : vector<2x32xf32>
    %250 = math.tanh %249 : vector<2x32xf32>
    %cst_87 = arith.constant 1.000000e+00 : f32
    %251 = vector.broadcast %cst_87 : f32 to vector<2x32xf32>
    %252 = arith.subf %251, %245 : vector<2x32xf32>
    %253 = arith.mulf %252, %250 : vector<2x32xf32>
    %254 = arith.mulf %245, %232 : vector<2x32xf32>
    %255 = arith.addf %253, %254 : vector<2x32xf32>
    %c0_88 = arith.constant 0 : index
    %c0_89 = arith.constant 0 : index
    %256 = vector.load %arg6[%c0_88, %c0_89] : memref<2x32xf32, #tpu.memory_space<vmem>>, vector<2x32xf32>
    tpu.vector_store %arg6[%c0_88, %c0_89], %255 {strides = array<i32>} : memref<2x32xf32, #tpu.memory_space<vmem>>, vector<2x32xf32>,
    %257 = arith.index_cast %c7_i32 : i32 to index
    %c0_90 = arith.constant 0 : index
    %c0_91 = arith.constant 0 : index
    %258 = vector.load %arg5[%257, %c0_90, %c0_91] : memref<8x2x32xf32, #tpu.memory_space<vmem>>, vector<1x2x32xf32>
    %259 = vector.shape_cast %258 : vector<1x2x32xf32> to vector<2x32xf32>
    %260 = vector.shape_cast %255 : vector<2x32xf32> to vector<1x2x32xf32>
    tpu.vector_store %arg5[%257, %c0_90, %c0_91], %260 {strides = array<i32>} : memref<8x2x32xf32, #tpu.memory_space<vmem>>, vector<1x2x32xf32>,
    %c8_i32 = arith.constant 8 : i32
    return
  }
  func.func @transform_0(%arg0: i32, %arg1: i32) -> (i32, i32, i32) {
    %c0_i32 = arith.constant 0 : i32
    %c0_i32_0 = arith.constant 0 : i32
    return %arg1, %arg0, %c0_i32 : i32, i32, i32
  }
  func.func @transform_1(%arg0: i32, %arg1: i32) -> (i32, i32) {
    %c0_i32 = arith.constant 0 : i32
    %c0_i32_0 = arith.constant 0 : i32
    %c0_i32_1 = arith.constant 0 : i32
    return %c0_i32, %c0_i32_0 : i32, i32
  }
  func.func @transform_2(%arg0: i32, %arg1: i32) -> (i32, i32) {
    %c0_i32 = arith.constant 0 : i32
    %c0_i32_0 = arith.constant 0 : i32
    %c0_i32_1 = arith.constant 0 : i32
    return %c0_i32, %c0_i32_0 : i32, i32
  }
  func.func @transform_3(%arg0: i32, %arg1: i32) -> (i32, i32, i32) {
    %c0_i32 = arith.constant 0 : i32
    %c0_i32_0 = arith.constant 0 : i32
    return %arg1, %arg0, %c0_i32 : i32, i32, i32
  }
}

</mosaic_0001>

<llo_original>
// kernel: decoder_forward.1
$region0: #{decoder_forward.1}
  #allocation0 [shape = 'u32[]', space=smem, size = 0x4, offset = 0x4, fixed_abs, tag = 'smem constant byte address 0x4 - core index']
  #allocation1 [shape = 'u32[72,128]{1,0:T(1,128)}', space=vmem, size = 0x9000, scoped, tag = 'internal scratch']
  #allocation2 [shape = 'f32[2,32]{1,0:T(2,128)}', space=vmem, size = 0x400, scoped, tag = 'scratch operand']
  %s0 = inlined_call_operand.vmem [shape: f32[8,2,96], index: 0, kind: input, shape index: {}]
  %s1 = inlined_call_operand.vmem [shape: bf16[32,96], index: 1, kind: input, shape index: {}]
  %s2 = inlined_call_operand.vmem [shape: f32[1,96], index: 2, kind: input, shape index: {}]
  %s3 = inlined_call_operand.vmem [shape: f32[8,2,32], index: 3, kind: output, shape index: {}]
  %s4 = sld [smem:[#allocation0]]
  $region26: #{decoder_forward.1} parent=0
    _
  %s6 = ssub.s32 1, %s4
  %s7 = scalar_select 0, %s6, %s4
  // Predicated region
  $region2: #{decoder_forward.1} parent=0 // pred_check
    _
  $region3: #{decoder_forward.1} parent=0 // pred_check_branch
    %9 = sbr.rel (0) target = $region5
  $region4: #{decoder_forward.1} parent=0 // pred_region
    _
  $region5: #{decoder_forward.1} parent=0 // pred_fallthru
    _
  // Predicated region
  $region6: #{decoder_forward.1} parent=0 // pred_check
    _
  $region7: #{decoder_forward.1} parent=0 // pred_check_branch
    %11 = sbr.rel (0) target = $region9
  $region8: #{decoder_forward.1} parent=0 // pred_region
    _
  $region9: #{decoder_forward.1} parent=0 // pred_fallthru
    _
  // Predicated region
  $region10: #{decoder_forward.1} parent=0 // pred_check
    _
  $region11: #{decoder_forward.1} parent=0 // pred_check_branch
    %13 = sbr.rel (0) target = $region13
  $region12: #{decoder_forward.1} parent=0 // pred_region
    _
  $region13: #{decoder_forward.1} parent=0 // pred_fallthru
    _
  %p15 = scmp.eq.s32.totalorder 0, 0
  // Predicated region
  $region14: #{decoder_forward.1} parent=0 // pred_check
    %p16 = pneg %p15
  $region15: #{decoder_forward.1} parent=0 // pred_check_branch
    %18 = sbr.rel (%p16) target = $region17
  $region16: #{decoder_forward.1} parent=0 // pred_region
    %vm19 = vcmask 254976
    %20 = vst.msk [vmem:[#allocation2] sm:$0x3] %vm19, 0.0
  $region17: #{decoder_forward.1} parent=0 // pred_fallthru
    _
  %v21 = vld [vmem:[%s1] sm:$0xf]
  %v22 = vld [vmem:[%s1 + $0x4] sm:$0xf]
  %v23 = vld [vmem:[%s1 + $0x8] sm:$0xf]
  %v24 = vld [vmem:[%s1 + $0xc] sm:$0xf]
  %v25 = vld [vmem:[%s2] sm:$0x1]
  %v26 = vld [vmem:[%s0] sm:$0x3]
  %v27 = vld [vmem:[#allocation2] sm:$0x3]
  %v28 = vpack.c.bf16 %v27, %v27
  %v30 = vperm.slane %v25, 0
  %v36 = vunpack.c.l.b16 %v21
  %v37 = vunpack.c.l.b16 %v22
  %v38 = vunpack.c.l.b16 %v23
  %v39 = vunpack.c.l.b16 %v24
  %v40 = vpack.c.b16 %v37, %v36
  %v41 = vpack.c.b16 %v39, %v38
  %vm44 = vcmask 261120
  %v46 = vsel %vm44, %v28, 0
  %48 = vmatpush.bf16.msra.mxu0 0
  %49 = vmatpush.bf16.msra.mxu0 0
  %50 = vmatpush.bf16.msra.mxu0 0
  %51 = vmatpush.bf16.msra.mxu0 0
  %52 = vmatpush.bf16.msra.mxu0 0
  %53 = vmatpush.bf16.msra.mxu0 0
  %54 = vmatpush.bf16.msra.mxu0 %v41
  %55 = vmatpush.bf16.msra.mxu0 %v40
  %56 = vmatmul.bf16.gmra.mxu0 %v46
  %v57 = vpop.f32.mrf.mxu0
  %v58 = vadd.f32 %v30, %v57
  %v59 = vpop.f32.mrf.mxu0
  %60 = vdwg.mxu0
  %v61 = vadd.f32 %v26, %v58
  %v62 = vxor.u32 %v61, 2147483648
  %v63 = vmul.f32 %v62, 1.442695
  %v64 = vpow.pop %v63
  %v65 = vadd.f32 %v64, 1.0
  %v66 = vrcp.pop %v65
  %v67 = vmul.f32 %v65, %v66
  %v68 = vsub.f32 1.0, %v67
  %v69 = vmul.f32 %v66, %v68
  %v70 = vadd.f32 %v66, %v69
  %vm71 = vweird.f32 %v65
  %vm72 = vweird.f32 %v66
  %vm73 = vmor %vm71, %vm72
  %v74 = vsel %vm73, %v66, %v70
  %v75 = vand.u32 2147483647, %v65
  %vm76 = vcmp.eq.f32.partialorder %v75, 8.507059e+37
  %v77 = vand.u32 %v65, 2147483648
  %v78 = vor.u32 1.1754944e-38, %v77
  %v79 = vsel %vm76, %v78, %v74
  %v80 = vmul.f32 1.0, %v79
  %82 = vrot.lane.b32.xlu0 %v58, 64
  %v83 = vpop.permute.xlu0 %82
  %v85 = vmul.f32 %v80, %v83
  %87 = vrot.lane.b32.xlu0 %v85, 64
  %v88 = vpop.permute.xlu0 %87
  %v90 = vadd.f32 %v26, %v88
  %v91 = vtanh.pop %v90
  %v92 = vsub.f32 1.0, %v80
  %94 = vrot.lane.b32.xlu0 %v91, 96
  %v95 = vpop.permute.xlu0 %94
  %v97 = vmul.f32 %v92, %v95
  %99 = vrot.lane.b32.xlu0 %v27, 32
  %v100 = vpop.permute.xlu0 %99
  %v102 = vmul.f32 %v80, %v100
  %v103 = vadd.f32 %v97, %v102
  %105 = vrot.lane.b32.xlu0 %v103, 96
  %v106 = vpop.permute.xlu0 %105
  %vm108 = vcmask 254976
  %109 = vst.msk [vmem:[#allocation2] sm:$0x3] %vm108, %v106
  %110 = vst.msk [vmem:[%s3] sm:$0x3] %vm108, %v106
  %s111 = scalar_lea.vmem %s0, 2
  %v112 = vld [vmem:[%s111] sm:$0x3]
  %v113 = vld [vmem:[#allocation2] sm:$0x3]
  %v114 = vpack.c.bf16 %v113, %v113
  %v116 = vsel %vm44, %v114, 0
  %118 = vmatpush.bf16.msra.mxu0 0
  %119 = vmatpush.bf16.msra.mxu0 0
  %120 = vmatpush.bf16.msra.mxu0 0
  %121 = vmatpush.bf16.msra.mxu0 0
  %122 = vmatpush.bf16.msra.mxu0 0
  %123 = vmatpush.bf16.msra.mxu0 0
  %124 = vmatpush.bf16.msra.mxu0 %v41
  %125 = vmatpush.bf16.msra.mxu0 %v40
  %126 = vmatmul.bf16.gmra.mxu0 %v116
  %v127 = vpop.f32.mrf.mxu0
  %v128 = vadd.f32 %v30, %v127
  %v129 = vpop.f32.mrf.mxu0
  %130 = vdwg.mxu0
  %v131 = vadd.f32 %v112, %v128
  %v132 = vxor.u32 %v131, 2147483648
  %v133 = vmul.f32 %v132, 1.442695
  %v134 = vpow.pop %v133
  %v135 = vadd.f32 %v134, 1.0
  %v136 = vrcp.pop %v135
  %v137 = vmul.f32 %v135, %v136
  %v138 = vsub.f32 1.0, %v137
  %v139 = vmul.f32 %v136, %v138
  %v140 = vadd.f32 %v136, %v139
  %vm141 = vweird.f32 %v135
  %vm142 = vweird.f32 %v136
  %vm143 = vmor %vm141, %vm142
  %v144 = vsel %vm143, %v136, %v140
  %v145 = vand.u32 2147483647, %v135
  %vm146 = vcmp.eq.f32.partialorder %v145, 8.507059e+37
  %v147 = vand.u32 %v135, 2147483648
  %v148 = vor.u32 1.1754944e-38, %v147
  %v149 = vsel %vm146, %v148, %v144
  %v150 = vmul.f32 1.0, %v149
  %152 = vrot.lane.b32.xlu0 %v128, 64
  %v153 = vpop.permute.xlu0 %152
  %v155 = vmul.f32 %v150, %v153
  %157 = vrot.lane.b32.xlu0 %v155, 64
  %v158 = vpop.permute.xlu0 %157
  %v160 = vadd.f32 %v112, %v158
  %v161 = vtanh.pop %v160
  %v162 = vsub.f32 1.0, %v150
  %164 = vrot.lane.b32.xlu0 %v161, 96
  %v165 = vpop.permute.xlu0 %164
  %v167 = vmul.f32 %v162, %v165
  %169 = vrot.lane.b32.xlu0 %v113, 32
  %v170 = vpop.permute.xlu0 %169
  %v172 = vmul.f32 %v150, %v170
  %v173 = vadd.f32 %v167, %v172
  %175 = vrot.lane.b32.xlu0 %v173, 96
  %v176 = vpop.permute.xlu0 %175
  %178 = vst.msk [vmem:[#allocation2] sm:$0x3] %vm108, %v176
  %s179 = scalar_lea.vmem %s3, 2
  %180 = vst.msk [vmem:[%s179] sm:$0x3] %vm108, %v176
  %s181 = scalar_lea.vmem %s0, 4
  %v182 = vld [vmem:[%s181] sm:$0x3]
  %v183 = vld [vmem:[#allocation2] sm:$0x3]
  %v184 = vpack.c.bf16 %v183, %v183
  %v186 = vsel %vm44, %v184, 0
  %188 = vmatpush.bf16.msra.mxu0 0
  %189 = vmatpush.bf16.msra.mxu0 0
  %190 = vmatpush.bf16.msra.mxu0 0
  %191 = vmatpush.bf16.msra.mxu0 0
  %192 = vmatpush.bf16.msra.mxu0 0
  %193 = vmatpush.bf16.msra.mxu0 0
  %194 = vmatpush.bf16.msra.mxu0 %v41
  %195 = vmatpush.bf16.msra.mxu0 %v40
  %196 = vmatmul.bf16.gmra.mxu0 %v186
  %v197 = vpop.f32.mrf.mxu0
  %v198 = vadd.f32 %v30, %v197
  %v199 = vpop.f32.mrf.mxu0
  %200 = vdwg.mxu0
  %v201 = vadd.f32 %v182, %v198
  %v202 = vxor.u32 %v201, 2147483648
  %v203 = vmul.f32 %v202, 1.442695
  %v204 = vpow.pop %v203
  %v205 = vadd.f32 %v204, 1.0
  %v206 = vrcp.pop %v205
  %v207 = vmul.f32 %v205, %v206
  %v208 = vsub.f32 1.0, %v207
  %v209 = vmul.f32 %v206, %v208
  %v210 = vadd.f32 %v206, %v209
  %vm211 = vweird.f32 %v205
  %vm212 = vweird.f32 %v206
  %vm213 = vmor %vm211, %vm212
  %v214 = vsel %vm213, %v206, %v210
  %v215 = vand.u32 2147483647, %v205
  %vm216 = vcmp.eq.f32.partialorder %v215, 8.507059e+37
  %v217 = vand.u32 %v205, 2147483648
  %v218 = vor.u32 1.1754944e-38, %v217
  %v219 = vsel %vm216, %v218, %v214
  %v220 = vmul.f32 1.0, %v219
  %222 = vrot.lane.b32.xlu0 %v198, 64
  %v223 = vpop.permute.xlu0 %222
  %v225 = vmul.f32 %v220, %v223
  %227 = vrot.lane.b32.xlu0 %v225, 64
  %v228 = vpop.permute.xlu0 %227
  %v230 = vadd.f32 %v182, %v228
  %v231 = vtanh.pop %v230
  %v232 = vsub.f32 1.0, %v220
  %234 = vrot.lane.b32.xlu0 %v231, 96
  %v235 = vpop.permute.xlu0 %234
  %v237 = vmul.f32 %v232, %v235
  %239 = vrot.lane.b32.xlu0 %v183, 32
  %v240 = vpop.permute.xlu0 %239
  %v242 = vmul.f32 %v220, %v240
  %v243 = vadd.f32 %v237, %v242
  %245 = vrot.lane.b32.xlu0 %v243, 96
  %v246 = vpop.permute.xlu0 %245
  %248 = vst.msk [vmem:[#allocation2] sm:$0x3] %vm108, %v246
  %s249 = scalar_lea.vmem %s3, 4
  %250 = vst.msk [vmem:[%s249] sm:$0x3] %vm108, %v246
  %s251 = scalar_lea.vmem %s0, 6
  %v252 = vld [vmem:[%s251] sm:$0x3]
  %v253 = vld [vmem:[#allocation2] sm:$0x3]
  %v254 = vpack.c.bf16 %v253, %v253
  %v256 = vsel %vm44, %v254, 0
  %258 = vmatpush.bf16.msra.mxu0 0
  %259 = vmatpush.bf16.msra.mxu0 0
  %260 = vmatpush.bf16.msra.mxu0 0
  %261 = vmatpush.bf16.msra.mxu0 0
  %262 = vmatpush.bf16.msra.mxu0 0
  %263 = vmatpush.bf16.msra.mxu0 0
  %264 = vmatpush.bf16.msra.mxu0 %v41
  %265 = vmatpush.bf16.msra.mxu0 %v40
  %266 = vmatmul.bf16.gmra.mxu0 %v256
  %v267 = vpop.f32.mrf.mxu0
  %v268 = vadd.f32 %v30, %v267
  %v269 = vpop.f32.mrf.mxu0
  %270 = vdwg.mxu0
  %v271 = vadd.f32 %v252, %v268
  %v272 = vxor.u32 %v271, 2147483648
  %v273 = vmul.f32 %v272, 1.442695
  %v274 = vpow.pop %v273
  %v275 = vadd.f32 %v274, 1.0
  %v276 = vrcp.pop %v275
  %v277 = vmul.f32 %v275, %v276
  %v278 = vsub.f32 1.0, %v277
  %v279 = vmul.f32 %v276, %v278
  %v280 = vadd.f32 %v276, %v279
  %vm281 = vweird.f32 %v275
  %vm282 = vweird.f32 %v276
  %vm283 = vmor %vm281, %vm282
  %v284 = vsel %vm283, %v276, %v280
  %v285 = vand.u32 2147483647, %v275
  %vm286 = vcmp.eq.f32.partialorder %v285, 8.507059e+37
  %v287 = vand.u32 %v275, 2147483648
  %v288 = vor.u32 1.1754944e-38, %v287
  %v289 = vsel %vm286, %v288, %v284
  %v290 = vmul.f32 1.0, %v289
  %292 = vrot.lane.b32.xlu0 %v268, 64
  %v293 = vpop.permute.xlu0 %292
  %v295 = vmul.f32 %v290, %v293
  %297 = vrot.lane.b32.xlu0 %v295, 64
  %v298 = vpop.permute.xlu0 %297
  %v300 = vadd.f32 %v252, %v298
  %v301 = vtanh.pop %v300
  %v302 = vsub.f32 1.0, %v290
  %304 = vrot.lane.b32.xlu0 %v301, 96
  %v305 = vpop.permute.xlu0 %304
  %v307 = vmul.f32 %v302, %v305
  %309 = vrot.lane.b32.xlu0 %v253, 32
  %v310 = vpop.permute.xlu0 %309
  %v312 = vmul.f32 %v290, %v310
  %v313 = vadd.f32 %v307, %v312
  %315 = vrot.lane.b32.xlu0 %v313, 96
  %v316 = vpop.permute.xlu0 %315
  %318 = vst.msk [vmem:[#allocation2] sm:$0x3] %vm108, %v316
  %s319 = scalar_lea.vmem %s3, 6
  %320 = vst.msk [vmem:[%s319] sm:$0x3] %vm108, %v316
  %s321 = scalar_lea.vmem %s0, 8
  %v322 = vld [vmem:[%s321] sm:$0x3]
  %v323 = vld [vmem:[#allocation2] sm:$0x3]
  %v324 = vpack.c.bf16 %v323, %v323
  %v326 = vsel %vm44, %v324, 0
  %328 = vmatpush.bf16.msra.mxu0 0
  %329 = vmatpush.bf16.msra.mxu0 0
  %330 = vmatpush.bf16.msra.mxu0 0
  %331 = vmatpush.bf16.msra.mxu0 0
  %332 = vmatpush.bf16.msra.mxu0 0
  %333 = vmatpush.bf16.msra.mxu0 0
  %334 = vmatpush.bf16.msra.mxu0 %v41
  %335 = vmatpush.bf16.msra.mxu0 %v40
  %336 = vmatmul.bf16.gmra.mxu0 %v326
  %v337 = vpop.f32.mrf.mxu0
  %v338 = vadd.f32 %v30, %v337
  %v339 = vpop.f32.mrf.mxu0
  %340 = vdwg.mxu0
  %v341 = vadd.f32 %v322, %v338
  %v342 = vxor.u32 %v341, 2147483648
  %v343 = vmul.f32 %v342, 1.442695
  %v344 = vpow.pop %v343
  %v345 = vadd.f32 %v344, 1.0
  %v346 = vrcp.pop %v345
  %v347 = vmul.f32 %v345, %v346
  %v348 = vsub.f32 1.0, %v347
  %v349 = vmul.f32 %v346, %v348
  %v350 = vadd.f32 %v346, %v349
  %vm351 = vweird.f32 %v345
  %vm352 = vweird.f32 %v346
  %vm353 = vmor %vm351, %vm352
  %v354 = vsel %vm353, %v346, %v350
  %v355 = vand.u32 2147483647, %v345
  %vm356 = vcmp.eq.f32.partialorder %v355, 8.507059e+37
  %v357 = vand.u32 %v345, 2147483648
  %v358 = vor.u32 1.1754944e-38, %v357
  %v359 = vsel %vm356, %v358, %v354
  %v360 = vmul.f32 1.0, %v359
  %362 = vrot.lane.b32.xlu0 %v338, 64
  %v363 = vpop.permute.xlu0 %362
  %v365 = vmul.f32 %v360, %v363
  %367 = vrot.lane.b32.xlu0 %v365, 64
  %v368 = vpop.permute.xlu0 %367
  %v370 = vadd.f32 %v322, %v368
  %v371 = vtanh.pop %v370
  %v372 = vsub.f32 1.0, %v360
  %374 = vrot.lane.b32.xlu0 %v371, 96
  %v375 = vpop.permute.xlu0 %374
  %v377 = vmul.f32 %v372, %v375
  %379 = vrot.lane.b32.xlu0 %v323, 32
  %v380 = vpop.permute.xlu0 %379
  %v382 = vmul.f32 %v360, %v380
  %v383 = vadd.f32 %v377, %v382
  %385 = vrot.lane.b32.xlu0 %v383, 96
  %v386 = vpop.permute.xlu0 %385
  %388 = vst.msk [vmem:[#allocation2] sm:$0x3] %vm108, %v386
  %s389 = scalar_lea.vmem %s3, 8
  %390 = vst.msk [vmem:[%s389] sm:$0x3] %vm108, %v386
  %s391 = scalar_lea.vmem %s0, 10
  %v392 = vld [vmem:[%s391] sm:$0x3]
  %v393 = vld [vmem:[#allocation2] sm:$0x3]
  %v394 = vpack.c.bf16 %v393, %v393
  %v396 = vsel %vm44, %v394, 0
  %398 = vmatpush.bf16.msra.mxu0 0
  %399 = vmatpush.bf16.msra.mxu0 0
  %400 = vmatpush.bf16.msra.mxu0 0
  %401 = vmatpush.bf16.msra.mxu0 0
  %402 = vmatpush.bf16.msra.mxu0 0
  %403 = vmatpush.bf16.msra.mxu0 0
  %404 = vmatpush.bf16.msra.mxu0 %v41
  %405 = vmatpush.bf16.msra.mxu0 %v40
  %406 = vmatmul.bf16.gmra.mxu0 %v396
  %v407 = vpop.f32.mrf.mxu0
  %v408 = vadd.f32 %v30, %v407
  %v409 = vpop.f32.mrf.mxu0
  %410 = vdwg.mxu0
  %v411 = vadd.f32 %v392, %v408
  %v412 = vxor.u32 %v411, 2147483648
  %v413 = vmul.f32 %v412, 1.442695
  %v414 = vpow.pop %v413
  %v415 = vadd.f32 %v414, 1.0
  %v416 = vrcp.pop %v415
  %v417 = vmul.f32 %v415, %v416
  %v418 = vsub.f32 1.0, %v417
  %v419 = vmul.f32 %v416, %v418
  %v420 = vadd.f32 %v416, %v419
  %vm421 = vweird.f32 %v415
  %vm422 = vweird.f32 %v416
  %vm423 = vmor %vm421, %vm422
  %v424 = vsel %vm423, %v416, %v420
  %v425 = vand.u32 2147483647, %v415
  %vm426 = vcmp.eq.f32.partialorder %v425, 8.507059e+37
  %v427 = vand.u32 %v415, 2147483648
  %v428 = vor.u32 1.1754944e-38, %v427
  %v429 = vsel %vm426, %v428, %v424
  %v430 = vmul.f32 1.0, %v429
  %432 = vrot.lane.b32.xlu0 %v408, 64
  %v433 = vpop.permute.xlu0 %432
  %v435 = vmul.f32 %v430, %v433
  %437 = vrot.lane.b32.xlu0 %v435, 64
  %v438 = vpop.permute.xlu0 %437
  %v440 = vadd.f32 %v392, %v438
  %v441 = vtanh.pop %v440
  %v442 = vsub.f32 1.0, %v430
  %444 = vrot.lane.b32.xlu0 %v441, 96
  %v445 = vpop.permute.xlu0 %444
  %v447 = vmul.f32 %v442, %v445
  %449 = vrot.lane.b32.xlu0 %v393, 32
  %v450 = vpop.permute.xlu0 %449
  %v452 = vmul.f32 %v430, %v450
  %v453 = vadd.f32 %v447, %v452
  %455 = vrot.lane.b32.xlu0 %v453, 96
  %v456 = vpop.permute.xlu0 %455
  %458 = vst.msk [vmem:[#allocation2] sm:$0x3] %vm108, %v456
  %s459 = scalar_lea.vmem %s3, 10
  %460 = vst.msk [vmem:[%s459] sm:$0x3] %vm108, %v456
  %s461 = scalar_lea.vmem %s0, 12
  %v462 = vld [vmem:[%s461] sm:$0x3]
  %v463 = vld [vmem:[#allocation2] sm:$0x3]
  %v464 = vpack.c.bf16 %v463, %v463
  %v466 = vsel %vm44, %v464, 0
  %468 = vmatpush.bf16.msra.mxu0 0
  %469 = vmatpush.bf16.msra.mxu0 0
  %470 = vmatpush.bf16.msra.mxu0 0
  %471 = vmatpush.bf16.msra.mxu0 0
  %472 = vmatpush.bf16.msra.mxu0 0
  %473 = vmatpush.bf16.msra.mxu0 0
  %474 = vmatpush.bf16.msra.mxu0 %v41
  %475 = vmatpush.bf16.msra.mxu0 %v40
  %476 = vmatmul.bf16.gmra.mxu0 %v466
  %v477 = vpop.f32.mrf.mxu0
  %v478 = vadd.f32 %v30, %v477
  %v479 = vpop.f32.mrf.mxu0
  %480 = vdwg.mxu0
  %v481 = vadd.f32 %v462, %v478
  %v482 = vxor.u32 %v481, 2147483648
  %v483 = vmul.f32 %v482, 1.442695
  %v484 = vpow.pop %v483
  %v485 = vadd.f32 %v484, 1.0
  %v486 = vrcp.pop %v485
  %v487 = vmul.f32 %v485, %v486
  %v488 = vsub.f32 1.0, %v487
  %v489 = vmul.f32 %v486, %v488
  %v490 = vadd.f32 %v486, %v489
  %vm491 = vweird.f32 %v485
  %vm492 = vweird.f32 %v486
  %vm493 = vmor %vm491, %vm492
  %v494 = vsel %vm493, %v486, %v490
  %v495 = vand.u32 2147483647, %v485
  %vm496 = vcmp.eq.f32.partialorder %v495, 8.507059e+37
  %v497 = vand.u32 %v485, 2147483648
  %v498 = vor.u32 1.1754944e-38, %v497
  %v499 = vsel %vm496, %v498, %v494
  %v500 = vmul.f32 1.0, %v499
  %502 = vrot.lane.b32.xlu0 %v478, 64
  %v503 = vpop.permute.xlu0 %502
  %v505 = vmul.f32 %v500, %v503
  %507 = vrot.lane.b32.xlu0 %v505, 64
  %v508 = vpop.permute.xlu0 %507
  %v510 = vadd.f32 %v462, %v508
  %v511 = vtanh.pop %v510
  %v512 = vsub.f32 1.0, %v500
  %514 = vrot.lane.b32.xlu0 %v511, 96
  %v515 = vpop.permute.xlu0 %514
  %v517 = vmul.f32 %v512, %v515
  %519 = vrot.lane.b32.xlu0 %v463, 32
  %v520 = vpop.permute.xlu0 %519
  %v522 = vmul.f32 %v500, %v520
  %v523 = vadd.f32 %v517, %v522
  %525 = vrot.lane.b32.xlu0 %v523, 96
  %v526 = vpop.permute.xlu0 %525
  %528 = vst.msk [vmem:[#allocation2] sm:$0x3] %vm108, %v526
  %s529 = scalar_lea.vmem %s3, 12
  %530 = vst.msk [vmem:[%s529] sm:$0x3] %vm108, %v526
  %s531 = scalar_lea.vmem %s0, 14
  %v532 = vld [vmem:[%s531] sm:$0x3]
  %v533 = vld [vmem:[#allocation2] sm:$0x3]
  %v534 = vpack.c.bf16 %v533, %v533
  %v536 = vsel %vm44, %v534, 0
  %538 = vmatpush.bf16.msra.mxu0 0
  %539 = vmatpush.bf16.msra.mxu0 0
  %540 = vmatpush.bf16.msra.mxu0 0
  %541 = vmatpush.bf16.msra.mxu0 0
  %542 = vmatpush.bf16.msra.mxu0 0
  %543 = vmatpush.bf16.msra.mxu0 0
  %544 = vmatpush.bf16.msra.mxu0 %v41
  %545 = vmatpush.bf16.msra.mxu0 %v40
  %546 = vmatmul.bf16.gmra.mxu0 %v536
  %v547 = vpop.f32.mrf.mxu0
  %v548 = vadd.f32 %v30, %v547
  %v549 = vpop.f32.mrf.mxu0
  %550 = vdwg.mxu0
  %v551 = vadd.f32 %v532, %v548
  %v552 = vxor.u32 %v551, 2147483648
  %v553 = vmul.f32 %v552, 1.442695
  %v554 = vpow.pop %v553
  %v555 = vadd.f32 %v554, 1.0
  %v556 = vrcp.pop %v555
  %v557 = vmul.f32 %v555, %v556
  %v558 = vsub.f32 1.0, %v557
  %v559 = vmul.f32 %v556, %v558
  %v560 = vadd.f32 %v556, %v559
  %vm561 = vweird.f32 %v555
  %vm562 = vweird.f32 %v556
  %vm563 = vmor %vm561, %vm562
  %v564 = vsel %vm563, %v556, %v560
  %v565 = vand.u32 2147483647, %v555
  %vm566 = vcmp.eq.f32.partialorder %v565, 8.507059e+37
  %v567 = vand.u32 %v555, 2147483648
  %v568 = vor.u32 1.1754944e-38, %v567
  %v569 = vsel %vm566, %v568, %v564
  %v570 = vmul.f32 1.0, %v569
  %572 = vrot.lane.b32.xlu0 %v548, 64
  %v573 = vpop.permute.xlu0 %572
  %v575 = vmul.f32 %v570, %v573
  %577 = vrot.lane.b32.xlu0 %v575, 64
  %v578 = vpop.permute.xlu0 %577
  %v580 = vadd.f32 %v532, %v578
  %v581 = vtanh.pop %v580
  %v582 = vsub.f32 1.0, %v570
  %584 = vrot.lane.b32.xlu0 %v581, 96
  %v585 = vpop.permute.xlu0 %584
  %v587 = vmul.f32 %v582, %v585
  %589 = vrot.lane.b32.xlu0 %v533, 32
  %v590 = vpop.permute.xlu0 %589
  %v592 = vmul.f32 %v570, %v590
  %v593 = vadd.f32 %v587, %v592
  %595 = vrot.lane.b32.xlu0 %v593, 96
  %v596 = vpop.permute.xlu0 %595
  %598 = vst.msk [vmem:[#allocation2] sm:$0x3] %vm108, %v596
  %s599 = scalar_lea.vmem %s3, 14
  %600 = vst.msk [vmem:[%s599] sm:$0x3] %vm108, %v596
  // Predicated region
  $region18: #{decoder_forward.1} parent=0 // pred_check
    _
  $region19: #{decoder_forward.1} parent=0 // pred_check_branch
    %602 = sbr.rel (0) target = $region21
  $region20: #{decoder_forward.1} parent=0 // pred_region
    _
  $region21: #{decoder_forward.1} parent=0 // pred_fallthru
    _
  // Predicated region
  $region22: #{decoder_forward.1} parent=0 // pred_check
    _
  $region23: #{decoder_forward.1} parent=0 // pred_check_branch
    %604 = sbr.rel (0) target = $region25
  $region24: #{decoder_forward.1} parent=0 // pred_region
    _
  $region25: #{decoder_forward.1} parent=0 // pred_fallthru
    _

</llo_original>
